<compile_context>
chip_gen: v6e
topology: v6e:2x2x1
jax: 0.10.0
libtpu: 0.0.40
codegen_flags: <defaults>
</compile_context>

<pallas_src>
import numpy as np
import jax
import jax.numpy as jnp
from jax.experimental import pallas as pl
from jax.experimental.pallas import tpu as pltpu

KERNEL_SIZE = 11
SIGMA = 1.5
DATA_RANGE = 1.0
K1, K2 = 0.01, 0.03
C1 = (K1 * DATA_RANGE) ** 2
C2 = (K2 * DATA_RANGE) ** 2


def _gauss_1d():
    # Same 1-D Gaussian torchmetrics builds (kernel_size=11, sigma=1.5).
    d = np.arange(KERNEL_SIZE, dtype=np.float64) - (KERNEL_SIZE - 1) / 2.0
    g = np.exp(-((d / SIGMA) ** 2) / 2.0)
    g = g / g.sum()
    return g.astype(np.float32)


_GAUSS = _gauss_1d()


def _band_matrices(Hp, W, Hv, Wv, k):
    """Band matrices for valid separable Gaussian filtering via matmul."""
    g = _GAUSS
    # Horizontal (right-multiply):  (t @ gw)[:, j] = sum_i g[i-j] * t[:, i]
    gw = np.zeros((W, Wv), np.float32)
    for j in range(Wv):
        gw[j:j + KERNEL_SIZE, j] = g
    # Vertical (left-multiply):     (gh @ h)[r, :] = sum_i g[i-r] * h[i, :]
    # Columns beyond the real H (pad rows) stay zero.
    gh = np.zeros((Hv, Hp), np.float32)
    for r in range(Hv):
        gh[r, r:r + KERNEL_SIZE] = g
    # Block-diagonal horizontal matrix for k images packed along the lane axis
    # (no cross-image mixing).
    gw_blk = np.zeros((k * W, k * Wv), np.float32)
    for b in range(k):
        gw_blk[b * W:(b + 1) * W, b * Wv:(b + 1) * Wv] = gw
    return gw_blk, gh


def _make_ssim_kernel(Hp, kW, Hv, kWv):
    def kernel(gw_ref, gh_ref, x_ref, y_ref, out_ref):
        x = x_ref[0]            # (Hp, kW) f32
        y = y_ref[0]            # (Hp, kW) f32
        gw = gw_ref[...]        # (kW, kWv)  block-diag horizontal band matrix
        gh = gh_ref[...]        # (Hv, Hp)   vertical band matrix

        # Stack the 5 signals along sublanes (Hp is a multiple of 8, so every
        # segment is sublane-aligned) -> one horizontal MXU matmul.
        # Everything stays f32: the sigma = E[x^2] - mu^2 cancellation is the
        # numerically sensitive step.
        s = jnp.concatenate([x, y, x * x, y * y, x * y], axis=0)      # (5Hp, kW)
        h = jnp.dot(s, gw, preferred_element_type=jnp.float32)        # (5Hp, kWv)

        # Vertical pass: one (Hv, Hp) @ (Hp, kWv) MXU matmul per signal, on
        # sublane-aligned static slices of h.
        def vpass(i):
            return jnp.dot(gh, h[i * Hp:(i + 1) * Hp, :],
                           preferred_element_type=jnp.float32)        # (Hv, kWv)

        mu_x = vpass(0)
        mu_y = vpass(1)
        e_xx = vpass(2)
        e_yy = vpass(3)
        e_xy = vpass(4)

        mu_x_sq = mu_x * mu_x
        mu_y_sq = mu_y * mu_y
        mu_xy = mu_x * mu_y
        sigma_x = e_xx - mu_x_sq
        sigma_y = e_yy - mu_y_sq
        sigma_xy = e_xy - mu_xy

        num = (2.0 * mu_xy + C1) * (2.0 * sigma_xy + C2)
        den = (mu_x_sq + mu_y_sq + C1) * (sigma_x + sigma_y + C2)
        # Exact divide kept for numerical parity with the reference; it is not
        # on the critical path after the MXU rewrite.
        ssim_map = num / den                                          # (Hv, kWv)

        # Per-group partial sum -> own output block (grid axis is parallel).
        out_ref[...] = jnp.zeros((1, 1, 1), jnp.float32) + jnp.sum(ssim_map)

    return kernel


def _ru(v, m):
    return ((v + m - 1) // m) * m


def _ssim_loss_impl(outputs, label):
    """Equivalent of Loss_SSIM.forward: scalar mean SSIM over the batch."""
    assert outputs.shape == label.shape
    B, C, H, W = outputs.shape
    Hv = H - (KERNEL_SIZE - 1)
    Wv = W - (KERNEL_SIZE - 1)
    assert Hv > 0 and Wv > 0, "spatial dims must be >= 11"

    N = B * C

    # Lane packing: pack k channel-images along the lane axis so the inner
    # (lane) dim is ~128 wide; k must divide N. Correctness is preserved by
    # the block-diagonal horizontal band matrix (no cross-image mixing).
    k_target = max(1, -(-128 // W))          # ceil(128 / W)
    k = 1
    for d in range(min(k_target, N), 0, -1):
        if N % d == 0:
            k = d
            break
    G = N // k
    kW = k * W
    kWv = k * Wv
    Hp = _ru(H, 8)                           # sublane-aligned row count

    x = outputs.reshape(G, k, H, W).transpose(0, 2, 1, 3).reshape(G, H, kW)
    y = label.reshape(G, k, H, W).transpose(0, 2, 1, 3).reshape(G, H, kW)
    x = x.astype(jnp.float32)
    y = y.astype(jnp.float32)
    if Hp != H:
        pad = ((0, 0), (0, Hp - H), (0, 0))
        x = jnp.pad(x, pad)
        y = jnp.pad(y, pad)

    gw_blk_np, gh_np = _band_matrices(Hp, W, Hv, Wv, k)
    gw_blk = jnp.asarray(gw_blk_np)          # (kW, kWv)  VMEM-resident
    gh = jnp.asarray(gh_np)                  # (Hv, Hp)   VMEM-resident

    kernel = _make_ssim_kernel(Hp, kW, Hv, kWv)

    # Scoped-VMEM sizing: double-buffered inputs + band matrices + temporaries
    # (rounded up to (8,128) tiles), with margin; capped for v7x's 64 MiB.
    kWp, kWvp = _ru(kW, 128), _ru(kWv, 128)
    Hvp = _ru(Hv, 8)
    est = 4 * (2 * 2 * Hp * kWp                              # x, y double-buffered
               + 2 * (_ru(kW, 8) * kWvp + Hvp * _ru(Hp, 128))  # band matrices
               + 10 * Hp * kWvp + 16 * Hvp * kWvp            # stacked / filtered temps
               ) + (2 << 20)
    vmem_limit = int(min(64 * 1024 * 1024, max(est, 32 * 1024 * 1024)))

    flops_per_step = (2 * 5 * Hp * kW * kWv          # horizontal matmul
                      + 2 * 5 * Hv * Hp * kWv        # vertical matmuls
                      + 14 * Hv * kWv)               # elementwise SSIM map
    bytes_per_step = 4 * (2 * Hp * kW + 1)
    cost = pl.CostEstimate(
        flops=int(G * flops_per_step),
        transcendentals=0,
        bytes_accessed=int(G * bytes_per_step + 4 * (kW * kWv + Hv * Hp)),
    )

    partials = pl.pallas_call(
        kernel,
        out_shape=jax.ShapeDtypeStruct((G, 1, 1), jnp.float32),
        grid_spec=pltpu.PrefetchScalarGridSpec(
            num_scalar_prefetch=0,
            grid=(G,),
            in_specs=[
                pl.BlockSpec((kW, kWv), lambda i: (0, 0)),      # G_w (resident)
                pl.BlockSpec((Hv, Hp), lambda i: (0, 0)),       # G_h (resident)
                pl.BlockSpec((1, Hp, kW), lambda i: (i, 0, 0)),  # x group
                pl.BlockSpec((1, Hp, kW), lambda i: (i, 0, 0)),  # y group
            ],
            out_specs=pl.BlockSpec((1, 1, 1), lambda i: (i, 0, 0)),
        ),
        compiler_params=pltpu.CompilerParams(
            dimension_semantics=("parallel",),
            vmem_limit_bytes=vmem_limit,
        ),
        cost_estimate=cost,
    )(gw_blk, gh, x, y)

    # Per-image mean then batch mean == global mean (equal counts per image).
    return jnp.sum(partials) / float(N * Hv * Wv)


ssim_loss = jax.jit(_ssim_loss_impl)


if __name__ == "__main__":
    key = jax.random.PRNGKey(0)
    k1, k2 = jax.random.split(key)
    # Small NCHW shapes consistent with an image-loss module.
    outputs = jax.random.uniform(k1, (2, 4, 16, 16), dtype=jnp.float32)
    label = jax.random.uniform(k2, (2, 4, 16, 16), dtype=jnp.float32)

    score = ssim_loss(outputs, label)
    jax.block_until_ready(score)
    print("KERNEL_OK")
</pallas_src>

<mosaic_0001>
module attributes {stable_mosaic.version = 11 : i64} {
  func.func @kernel(%arg0: i32, %arg1: memref<128x48xf32, #tpu.memory_space<vmem>>, %arg2: memref<6x16xf32, #tpu.memory_space<vmem>>, %arg3: memref<1x16x128xf32, #tpu.memory_space<vmem>>, %arg4: memref<1x16x128xf32, #tpu.memory_space<vmem>>, %arg5: memref<1x1x1xf32, #tpu.memory_space<vmem>>) attributes {dimension_semantics = [#tpu.dimension_semantics<parallel>], iteration_bounds = array<i64: 1>, scalar_prefetch = 0 : i64, scratch_operands = 0 : i64, tpu.core_type = #tpu.core_type<tc>, window_params = [{pipeline_mode = #tpu.pipeline_mode<synchronous>, transform_indices = @transform_0, window_bounds = array<i64: 128, 48>}, {pipeline_mode = #tpu.pipeline_mode<synchronous>, transform_indices = @transform_1, window_bounds = array<i64: 6, 16>}, {transform_indices = @transform_2, window_bounds = array<i64: 1, 16, 128>}, {transform_indices = @transform_3, window_bounds = array<i64: 1, 16, 128>}, {transform_indices = @transform_4, window_bounds = array<i64: 1, 1, 1>}]} {
    %c0 = arith.constant 0 : index
    %c0_0 = arith.constant 0 : index
    %c0_1 = arith.constant 0 : index
    %0 = vector.load %arg3[%c0, %c0_0, %c0_1] : memref<1x16x128xf32, #tpu.memory_space<vmem>>, vector<1x16x128xf32>
    %1 = vector.shape_cast %0 : vector<1x16x128xf32> to vector<16x128xf32>
    %c0_2 = arith.constant 0 : index
    %c0_3 = arith.constant 0 : index
    %c0_4 = arith.constant 0 : index
    %2 = vector.load %arg4[%c0_2, %c0_3, %c0_4] : memref<1x16x128xf32, #tpu.memory_space<vmem>>, vector<1x16x128xf32>
    %3 = vector.shape_cast %2 : vector<1x16x128xf32> to vector<16x128xf32>
    %c0_5 = arith.constant 0 : index
    %c0_6 = arith.constant 0 : index
    %4 = vector.load %arg1[%c0_5, %c0_6] : memref<128x48xf32, #tpu.memory_space<vmem>>, vector<128x48xf32>
    %c0_7 = arith.constant 0 : index
    %c0_8 = arith.constant 0 : index
    %5 = vector.load %arg2[%c0_7, %c0_8] : memref<6x16xf32, #tpu.memory_space<vmem>>, vector<6x16xf32>
    %6 = arith.mulf %1, %1 : vector<16x128xf32>
    %7 = arith.mulf %3, %3 : vector<16x128xf32>
    %8 = arith.mulf %1, %3 : vector<16x128xf32>
    %9 = tpu.concatenate %1, %3, %6, %7, %8 in 0 : vector<16x128xf32>, vector<16x128xf32>, vector<16x128xf32>, vector<16x128xf32>, vector<16x128xf32> -> vector<80x128xf32>
    %cst = arith.constant dense<0.000000e+00> : vector<80x48xf32>
    %10 = tpu.matmul %9, %4, %cst {dimension_numbers = #tpu.dot_dimension_numbers<[1], [0], [0], [1], [0, 0, 1, 1], [], []>} : vector<80x128xf32>, vector<128x48xf32>, vector<80x48xf32> -> vector<80x48xf32>
    %11 = vector.extract_strided_slice %10 {offsets = [0, 0], sizes = [16, 48], strides = [1, 1]} : vector<80x48xf32> to vector<16x48xf32>
    %cst_9 = arith.constant dense<0.000000e+00> : vector<6x48xf32>
    %12 = tpu.matmul %5, %11, %cst_9 {dimension_numbers = #tpu.dot_dimension_numbers<[1], [0], [0], [1], [0, 0, 1, 1], [], []>} : vector<6x16xf32>, vector<16x48xf32>, vector<6x48xf32> -> vector<6x48xf32>
    %13 = vector.extract_strided_slice %10 {offsets = [16, 0], sizes = [16, 48], strides = [1, 1]} : vector<80x48xf32> to vector<16x48xf32>
    %cst_10 = arith.constant dense<0.000000e+00> : vector<6x48xf32>
    %14 = tpu.matmul %5, %13, %cst_10 {dimension_numbers = #tpu.dot_dimension_numbers<[1], [0], [0], [1], [0, 0, 1, 1], [], []>} : vector<6x16xf32>, vector<16x48xf32>, vector<6x48xf32> -> vector<6x48xf32>
    %15 = vector.extract_strided_slice %10 {offsets = [32, 0], sizes = [16, 48], strides = [1, 1]} : vector<80x48xf32> to vector<16x48xf32>
    %cst_11 = arith.constant dense<0.000000e+00> : vector<6x48xf32>
    %16 = tpu.matmul %5, %15, %cst_11 {dimension_numbers = #tpu.dot_dimension_numbers<[1], [0], [0], [1], [0, 0, 1, 1], [], []>} : vector<6x16xf32>, vector<16x48xf32>, vector<6x48xf32> -> vector<6x48xf32>
    %17 = vector.extract_strided_slice %10 {offsets = [48, 0], sizes = [16, 48], strides = [1, 1]} : vector<80x48xf32> to vector<16x48xf32>
    %cst_12 = arith.constant dense<0.000000e+00> : vector<6x48xf32>
    %18 = tpu.matmul %5, %17, %cst_12 {dimension_numbers = #tpu.dot_dimension_numbers<[1], [0], [0], [1], [0, 0, 1, 1], [], []>} : vector<6x16xf32>, vector<16x48xf32>, vector<6x48xf32> -> vector<6x48xf32>
    %19 = vector.extract_strided_slice %10 {offsets = [64, 0], sizes = [16, 48], strides = [1, 1]} : vector<80x48xf32> to vector<16x48xf32>
    %cst_13 = arith.constant dense<0.000000e+00> : vector<6x48xf32>
    %20 = tpu.matmul %5, %19, %cst_13 {dimension_numbers = #tpu.dot_dimension_numbers<[1], [0], [0], [1], [0, 0, 1, 1], [], []>} : vector<6x16xf32>, vector<16x48xf32>, vector<6x48xf32> -> vector<6x48xf32>
    %21 = arith.mulf %12, %12 : vector<6x48xf32>
    %22 = arith.mulf %14, %14 : vector<6x48xf32>
    %23 = arith.mulf %12, %14 : vector<6x48xf32>
    %24 = arith.subf %16, %21 : vector<6x48xf32>
    %25 = arith.subf %18, %22 : vector<6x48xf32>
    %26 = arith.subf %20, %23 : vector<6x48xf32>
    %cst_14 = arith.constant 2.000000e+00 : f32
    %27 = vector.broadcast %cst_14 : f32 to vector<6x48xf32>
    %28 = arith.mulf %27, %23 : vector<6x48xf32>
    %cst_15 = arith.constant 9.99999974E-5 : f32
    %29 = vector.broadcast %cst_15 : f32 to vector<6x48xf32>
    %30 = arith.addf %28, %29 : vector<6x48xf32>
    %cst_16 = arith.constant 2.000000e+00 : f32
    %31 = vector.broadcast %cst_16 : f32 to vector<6x48xf32>
    %32 = arith.mulf %31, %26 : vector<6x48xf32>
    %cst_17 = arith.constant 8.99999984E-4 : f32
    %33 = vector.broadcast %cst_17 : f32 to vector<6x48xf32>
    %34 = arith.addf %32, %33 : vector<6x48xf32>
    %35 = arith.mulf %30, %34 : vector<6x48xf32>
    %36 = arith.addf %21, %22 : vector<6x48xf32>
    %cst_18 = arith.constant 9.99999974E-5 : f32
    %37 = vector.broadcast %cst_18 : f32 to vector<6x48xf32>
    %38 = arith.addf %36, %37 : vector<6x48xf32>
    %39 = arith.addf %24, %25 : vector<6x48xf32>
    %cst_19 = arith.constant 8.99999984E-4 : f32
    %40 = vector.broadcast %cst_19 : f32 to vector<6x48xf32>
    %41 = arith.addf %39, %40 : vector<6x48xf32>
    %42 = arith.mulf %38, %41 : vector<6x48xf32>
    %43 = arith.divf %35, %42 : vector<6x48xf32>
    %cst_20 = arith.constant 0.000000e+00 : f32
    %44 = vector.broadcast %cst_20 : f32 to vector<1x1x1xf32>
    %45 = vector.shape_cast %43 : vector<6x48xf32> to vector<1x6x48xf32>
    %cst_21 = arith.constant dense<0.000000e+00> : vector<1xf32>
    %46 = vector.multi_reduction <add>, %45, %cst_21 [1, 2] : vector<1x6x48xf32> to vector<1xf32>
    %47 = vector.shape_cast %46 : vector<1xf32> to vector<1x1x1xf32>
    %48 = vector.extract %47[0, 0, 0] : f32 from vector<1x1x1xf32>
    %49 = vector.broadcast %48 : f32 to vector<1x1x1xf32>
    %50 = arith.addf %44, %49 : vector<1x1x1xf32>
    %c0_22 = arith.constant 0 : index
    %c0_23 = arith.constant 0 : index
    %c0_24 = arith.constant 0 : index
    %51 = vector.load %arg5[%c0_22, %c0_23, %c0_24] : memref<1x1x1xf32, #tpu.memory_space<vmem>>, vector<1x1x1xf32>
    tpu.vector_store %arg5[%c0_22, %c0_23, %c0_24], %50 {strides = array<i32>} : memref<1x1x1xf32, #tpu.memory_space<vmem>>, vector<1x1x1xf32>,
    return
  }
  func.func @transform_0(%arg0: i32) -> (i32, i32) {
    %c0_i32 = arith.constant 0 : i32
    %c0_i32_0 = arith.constant 0 : i32
    %c0_i32_1 = arith.constant 0 : i32
    return %c0_i32, %c0_i32_0 : i32, i32
  }
  func.func @transform_1(%arg0: i32) -> (i32, i32) {
    %c0_i32 = arith.constant 0 : i32
    %c0_i32_0 = arith.constant 0 : i32
    %c0_i32_1 = arith.constant 0 : i32
    return %c0_i32, %c0_i32_0 : i32, i32
  }
  func.func @transform_2(%arg0: i32) -> (i32, i32, i32) {
    %c0_i32 = arith.constant 0 : i32
    %c0_i32_0 = arith.constant 0 : i32
    %c0_i32_1 = arith.constant 0 : i32
    return %arg0, %c0_i32, %c0_i32_0 : i32, i32, i32
  }
  func.func @transform_3(%arg0: i32) -> (i32, i32, i32) {
    %c0_i32 = arith.constant 0 : i32
    %c0_i32_0 = arith.constant 0 : i32
    %c0_i32_1 = arith.constant 0 : i32
    return %arg0, %c0_i32, %c0_i32_0 : i32, i32, i32
  }
  func.func @transform_4(%arg0: i32) -> (i32, i32, i32) {
    %c0_i32 = arith.constant 0 : i32
    %c0_i32_0 = arith.constant 0 : i32
    %c0_i32_1 = arith.constant 0 : i32
    return %arg0, %c0_i32, %c0_i32_0 : i32, i32, i32
  }
}

</mosaic_0001>

<llo_original>
// kernel: _ssim_loss_impl.1
$region0: #{_ssim_loss_impl.1}
  #allocation0 [shape = 'u32[]', space=smem, size = 0x4, offset = 0x4, fixed_abs, tag = 'smem constant byte address 0x4 - core index']
  #allocation1 [shape = 'u32[144,128]{1,0:T(1,128)}', space=vmem, size = 0x12000, scoped, tag = 'internal scratch']
  %s0 = inlined_call_operand.vmem [shape: f32[128,48], index: 0, kind: input, shape index: {}]
  %s1 = inlined_call_operand.vmem [shape: f32[6,16], index: 1, kind: input, shape index: {}]
  %s2 = inlined_call_operand.vmem [shape: f32[1,16,128], index: 2, kind: input, shape index: {}]
  %s3 = inlined_call_operand.vmem [shape: f32[1,16,128], index: 3, kind: input, shape index: {}]
  %s4 = inlined_call_operand.hbm [shape: f32[1,1,1], index: 4, kind: output, shape index: {}]
  %s5 = sld [smem:[#allocation0]]
  $region26: #{_ssim_loss_impl.1} parent=0
    _
  %s7 = ssub.s32 1, %s5
  %s8 = scalar_select 0, %s7, %s5
  $region1: #{_ssim_loss_impl.1} parent=0
    #allocation2 [shape = 'u8[512]{0}', space=vmem, size = 0x400, scoped, tag = 'output window, operand 0, single buffered']
    #allocation3 [shape = 's32[1]{0}', space=sflag, size = 0x4, scoped, tag = 'scoped memory for _ssim_loss_impl.1']
    %9 = vsyncpa [#allocation3], 0
    // Predicated region
    $region2: #{_ssim_loss_impl.1} parent=1 // pred_check
      _
    $region3: #{_ssim_loss_impl.1} parent=1 // pred_check_branch
      %11 = sbr.rel (0) target = $region5
    $region4: #{_ssim_loss_impl.1} parent=1 // pred_region
      _
    $region5: #{_ssim_loss_impl.1} parent=1 // pred_fallthru
      _
    // Predicated region
    $region6: #{_ssim_loss_impl.1} parent=1 // pred_check
      _
    $region7: #{_ssim_loss_impl.1} parent=1 // pred_check_branch
      %13 = sbr.rel (0) target = $region9
    $region8: #{_ssim_loss_impl.1} parent=1 // pred_region
      _
    $region9: #{_ssim_loss_impl.1} parent=1 // pred_fallthru
      _
    // Predicated region
    $region10: #{_ssim_loss_impl.1} parent=1 // pred_check
      _
    $region11: #{_ssim_loss_impl.1} parent=1 // pred_check_branch
      %15 = sbr.rel (0) target = $region13
    $region12: #{_ssim_loss_impl.1} parent=1 // pred_region
      _
    $region13: #{_ssim_loss_impl.1} parent=1 // pred_fallthru
      _
    // Predicated region
    $region14: #{_ssim_loss_impl.1} parent=1 // pred_check
      _
    $region15: #{_ssim_loss_impl.1} parent=1 // pred_check_branch
      %17 = sbr.rel (0) target = $region17
    $region16: #{_ssim_loss_impl.1} parent=1 // pred_region
      _
    $region17: #{_ssim_loss_impl.1} parent=1 // pred_fallthru
      _
    %v18 = vld [vmem:[%s2] sm:$0xff]
    %v19 = vld [vmem:[%s2 + $0x8] sm:$0xff]
    %v20 = vld [vmem:[%s3] sm:$0xff]
    %v21 = vld [vmem:[%s3 + $0x8] sm:$0xff]
    %v22 = vld [vmem:[%s0] sm:$0xff]
    %v23 = vld [vmem:[%s0 + $0x8] sm:$0xff]
    %v24 = vld [vmem:[%s0 + $0x10] sm:$0xff]
    %v25 = vld [vmem:[%s0 + $0x18] sm:$0xff]
    %v26 = vld [vmem:[%s0 + $0x20] sm:$0xff]
    %v27 = vld [vmem:[%s0 + $0x28] sm:$0xff]
    %v28 = vld [vmem:[%s0 + $0x30] sm:$0xff]
    %v29 = vld [vmem:[%s0 + $0x38] sm:$0xff]
    %v30 = vld [vmem:[%s0 + $0x40] sm:$0xff]
    %v31 = vld [vmem:[%s0 + $0x48] sm:$0xff]
    %v32 = vld [vmem:[%s0 + $0x50] sm:$0xff]
    %v33 = vld [vmem:[%s0 + $0x58] sm:$0xff]
    %v34 = vld [vmem:[%s0 + $0x60] sm:$0xff]
    %v35 = vld [vmem:[%s0 + $0x68] sm:$0xff]
    %v36 = vld [vmem:[%s0 + $0x70] sm:$0xff]
    %v37 = vld [vmem:[%s0 + $0x78] sm:$0xff]
    %v38 = vld [vmem:[%s1] sm:$0x3f]
    %v39 = vmul.f32 %v18, %v18
    %v40 = vmul.f32 %v19, %v19
    %v41 = vmul.f32 %v20, %v20
    %v42 = vmul.f32 %v21, %v21
    %v43 = vmul.f32 %v18, %v20
    %v44 = vmul.f32 %v19, %v21
    %45 = vmatprep.subr.mxu0 0.0
    %46 = vmatpush1.msra.mxu0 %v37
    %47 = vmatprep.subr.mxu0 0.0
    %48 = vmatpush1.msra.mxu0 %v36
    %49 = vmatprep.subr.mxu0 0.0
    %50 = vmatpush1.msra.mxu0 %v35
    %51 = vmatprep.subr.mxu0 0.0
    %52 = vmatpush1.msra.mxu0 %v34
    %53 = vmatprep.subr.mxu0 0.0
    %54 = vmatpush1.msra.mxu0 %v33
    %55 = vmatprep.subr.mxu0 0.0
    %56 = vmatpush1.msra.mxu0 %v32
    %57 = vmatprep.subr.mxu0 0.0
    %58 = vmatpush1.msra.mxu0 %v31
    %59 = vmatprep.subr.mxu0 0.0
    %60 = vmatpush1.msra.mxu0 %v30
    %61 = vmatprep.subr.mxu0 0.0
    %62 = vmatpush1.msra.mxu0 %v29
    %63 = vmatprep.subr.mxu0 0.0
    %64 = vmatpush1.msra.mxu0 %v28
    %65 = vmatprep.subr.mxu0 0.0
    %66 = vmatpush1.msra.mxu0 %v27
    %67 = vmatprep.subr.mxu0 0.0
    %68 = vmatpush1.msra.mxu0 %v26
    %69 = vmatprep.subr.mxu0 0.0
    %70 = vmatpush1.msra.mxu0 %v25
    %71 = vmatprep.subr.mxu0 0.0
    %72 = vmatpush1.msra.mxu0 %v24
    %73 = vmatprep.subr.mxu0 0.0
    %74 = vmatpush1.msra.mxu0 %v23
    %75 = vmatprep.subr.mxu0 0.0
    %76 = vmatpush1.msra.mxu0 %v22
    %77 = vmatprep.subr.mxu0 0.0
    %78 = vmatpush2.msra.mxu0 0.0
    %79 = vmatprep.subr.mxu0 0.0
    %80 = vmatpush2.msra.mxu0 0.0
    %81 = vmatprep.subr.mxu0 0.0
    %82 = vmatpush2.msra.mxu0 0.0
    %83 = vmatprep.subr.mxu0 0.0
    %84 = vmatpush2.msra.mxu0 0.0
    %85 = vmatprep.subr.mxu0 0.0
    %86 = vmatpush2.msra.mxu0 0.0
    %87 = vmatprep.subr.mxu0 0.0
    %88 = vmatpush2.msra.mxu0 0.0
    %89 = vmatprep.subr.mxu0 0.0
    %90 = vmatpush2.msra.mxu0 0.0
    %91 = vmatprep.subr.mxu0 0.0
    %92 = vmatpush2.msra.mxu0 0.0
    %93 = vmatprep.subr.mxu0 0.0
    %94 = vmatpush2.msra.mxu0 0.0
    %95 = vmatprep.subr.mxu0 0.0
    %96 = vmatpush2.msra.mxu0 0.0
    %97 = vmatprep.subr.mxu0 0.0
    %98 = vmatpush2.msra.mxu0 0.0
    %99 = vmatprep.subr.mxu0 0.0
    %100 = vmatpush2.msra.mxu0 0.0
    %101 = vmatprep.subr.mxu0 0.0
    %102 = vmatpush2.msra.mxu0 0.0
    %103 = vmatprep.subr.mxu0 0.0
    %104 = vmatpush2.msra.mxu0 0.0
    %105 = vmatprep.subr.mxu0 0.0
    %106 = vmatpush2.msra.mxu0 0.0
    %107 = vmatprep.subr.mxu0 0.0
    %108 = vmatpush2.msra.mxu0 0.0
    %109 = vmatprep.mubr.f32.mxu0 0.0
    %110 = vmatmul.mubr.f32.gmra.mxu0 %v18
    %v111 = vpop.f32.mrf.mxu0
    %v112 = vadd.f32 0.0, %v111
    %v113 = vpop.f32.mrf.mxu0
    %114 = vmatprep.mubr.f32.mxu0 0.0
    %115 = vmatmul.mubr.f32.gmra.mxu0 %v19
    %v116 = vpop.f32.mrf.mxu0
    %v117 = vadd.f32 0.0, %v116
    %v118 = vpop.f32.mrf.mxu0
    %119 = vmatprep.mubr.f32.mxu0 0.0
    %120 = vmatmul.mubr.f32.gmra.mxu0 %v20
    %v121 = vpop.f32.mrf.mxu0
    %v122 = vadd.f32 0.0, %v121
    %v123 = vpop.f32.mrf.mxu0
    %124 = vmatprep.mubr.f32.mxu0 0.0
    %125 = vmatmul.mubr.f32.gmra.mxu0 %v21
    %v126 = vpop.f32.mrf.mxu0
    %v127 = vadd.f32 0.0, %v126
    %v128 = vpop.f32.mrf.mxu0
    %129 = vmatprep.mubr.f32.mxu0 0.0
    %130 = vmatmul.mubr.f32.gmra.mxu0 %v39
    %v131 = vpop.f32.mrf.mxu0
    %v132 = vadd.f32 0.0, %v131
    %v133 = vpop.f32.mrf.mxu0
    %134 = vmatprep.mubr.f32.mxu0 0.0
    %135 = vmatmul.mubr.f32.gmra.mxu0 %v40
    %v136 = vpop.f32.mrf.mxu0
    %v137 = vadd.f32 0.0, %v136
    %v138 = vpop.f32.mrf.mxu0
    %139 = vmatprep.mubr.f32.mxu0 0.0
    %140 = vmatmul.mubr.f32.gmra.mxu0 %v41
    %v141 = vpop.f32.mrf.mxu0
    %v142 = vadd.f32 0.0, %v141
    %v143 = vpop.f32.mrf.mxu0
    %144 = vmatprep.mubr.f32.mxu0 0.0
    %145 = vmatmul.mubr.f32.gmra.mxu0 %v42
    %v146 = vpop.f32.mrf.mxu0
    %v147 = vadd.f32 0.0, %v146
    %v148 = vpop.f32.mrf.mxu0
    %149 = vmatprep.mubr.f32.mxu0 0.0
    %150 = vmatmul.mubr.f32.gmra.mxu0 %v43
    %v151 = vpop.f32.mrf.mxu0
    %v152 = vadd.f32 0.0, %v151
    %v153 = vpop.f32.mrf.mxu0
    %154 = vmatprep.mubr.f32.mxu0 0.0
    %155 = vmatmul.mubr.f32.gmra.mxu0 %v44
    %v156 = vpop.f32.mrf.mxu0
    %v157 = vadd.f32 0.0, %v156
    %v158 = vpop.f32.mrf.mxu0
    %159 = vdwg.mxu0
    %vm160 = vcmask 130048
    %v162 = vsel %vm160, %v38, 0
    %164 = vmatprep.subr.mxu0 0.0
    %165 = vmatpush1.msra.mxu0 0.0
    %166 = vmatprep.subr.mxu0 0.0
    %167 = vmatpush1.msra.mxu0 0.0
    %168 = vmatprep.subr.mxu0 0.0
    %169 = vmatpush1.msra.mxu0 0.0
    %170 = vmatprep.subr.mxu0 0.0
    %171 = vmatpush1.msra.mxu0 0.0
    %172 = vmatprep.subr.mxu0 0.0
    %173 = vmatpush1.msra.mxu0 0.0
    %174 = vmatprep.subr.mxu0 0.0
    %175 = vmatpush1.msra.mxu0 0.0
    %176 = vmatprep.subr.mxu0 0.0
    %177 = vmatpush1.msra.mxu0 0.0
    %178 = vmatprep.subr.mxu0 0.0
    %179 = vmatpush1.msra.mxu0 0.0
    %180 = vmatprep.subr.mxu0 0.0
    %181 = vmatpush1.msra.mxu0 0.0
    %182 = vmatprep.subr.mxu0 0.0
    %183 = vmatpush1.msra.mxu0 0.0
    %184 = vmatprep.subr.mxu0 0.0
    %185 = vmatpush1.msra.mxu0 0.0
    %186 = vmatprep.subr.mxu0 0.0
    %187 = vmatpush1.msra.mxu0 0.0
    %188 = vmatprep.subr.mxu0 0.0
    %189 = vmatpush1.msra.mxu0 0.0
    %190 = vmatprep.subr.mxu0 0.0
    %191 = vmatpush1.msra.mxu0 0.0
    %192 = vmatprep.subr.mxu0 0.0
    %193 = vmatpush1.msra.mxu0 %v117
    %194 = vmatprep.subr.mxu0 0.0
    %195 = vmatpush1.msra.mxu0 %v112
    %196 = vmatprep.subr.mxu0 0.0
    %197 = vmatpush2.msra.mxu0 0.0
    %198 = vmatprep.subr.mxu0 0.0
    %199 = vmatpush2.msra.mxu0 0.0
    %200 = vmatprep.subr.mxu0 0.0
    %201 = vmatpush2.msra.mxu0 0.0
    %202 = vmatprep.subr.mxu0 0.0
    %203 = vmatpush2.msra.mxu0 0.0
    %204 = vmatprep.subr.mxu0 0.0
    %205 = vmatpush2.msra.mxu0 0.0
    %206 = vmatprep.subr.mxu0 0.0
    %207 = vmatpush2.msra.mxu0 0.0
    %208 = vmatprep.subr.mxu0 0.0
    %209 = vmatpush2.msra.mxu0 0.0
    %210 = vmatprep.subr.mxu0 0.0
    %211 = vmatpush2.msra.mxu0 0.0
    %212 = vmatprep.subr.mxu0 0.0
    %213 = vmatpush2.msra.mxu0 0.0
    %214 = vmatprep.subr.mxu0 0.0
    %215 = vmatpush2.msra.mxu0 0.0
    %216 = vmatprep.subr.mxu0 0.0
    %217 = vmatpush2.msra.mxu0 0.0
    %218 = vmatprep.subr.mxu0 0.0
    %219 = vmatpush2.msra.mxu0 0.0
    %220 = vmatprep.subr.mxu0 0.0
    %221 = vmatpush2.msra.mxu0 0.0
    %222 = vmatprep.subr.mxu0 0.0
    %223 = vmatpush2.msra.mxu0 0.0
    %224 = vmatprep.subr.mxu0 0.0
    %225 = vmatpush2.msra.mxu0 0.0
    %226 = vmatprep.subr.mxu0 0.0
    %227 = vmatpush2.msra.mxu0 0.0
    %228 = vmatprep.mubr.f32.mxu0 0.0
    %229 = vmatmul.mubr.f32.gmra.mxu0 %v162
    %v230 = vpop.f32.mrf.mxu0
    %v231 = vadd.f32 0.0, %v230
    %v232 = vpop.f32.mrf.mxu0
    %233 = vdwg.mxu0
    %234 = vmatprep.subr.mxu0 0.0
    %235 = vmatpush1.msra.mxu0 0.0
    %236 = vmatprep.subr.mxu0 0.0
    %237 = vmatpush1.msra.mxu0 0.0
    %238 = vmatprep.subr.mxu0 0.0
    %239 = vmatpush1.msra.mxu0 0.0
    %240 = vmatprep.subr.mxu0 0.0
    %241 = vmatpush1.msra.mxu0 0.0
    %242 = vmatprep.subr.mxu0 0.0
    %243 = vmatpush1.msra.mxu0 0.0
    %244 = vmatprep.subr.mxu0 0.0
    %245 = vmatpush1.msra.mxu0 0.0
    %246 = vmatprep.subr.mxu0 0.0
    %247 = vmatpush1.msra.mxu0 0.0
    %248 = vmatprep.subr.mxu0 0.0
    %249 = vmatpush1.msra.mxu0 0.0
    %250 = vmatprep.subr.mxu0 0.0
    %251 = vmatpush1.msra.mxu0 0.0
    %252 = vmatprep.subr.mxu0 0.0
    %253 = vmatpush1.msra.mxu0 0.0
    %254 = vmatprep.subr.mxu0 0.0
    %255 = vmatpush1.msra.mxu0 0.0
    %256 = vmatprep.subr.mxu0 0.0
    %257 = vmatpush1.msra.mxu0 0.0
    %258 = vmatprep.subr.mxu0 0.0
    %259 = vmatpush1.msra.mxu0 0.0
    %260 = vmatprep.subr.mxu0 0.0
    %261 = vmatpush1.msra.mxu0 0.0
    %262 = vmatprep.subr.mxu0 0.0
    %263 = vmatpush1.msra.mxu0 %v127
    %264 = vmatprep.subr.mxu0 0.0
    %265 = vmatpush1.msra.mxu0 %v122
    %266 = vmatprep.subr.mxu0 0.0
    %267 = vmatpush2.msra.mxu0 0.0
    %268 = vmatprep.subr.mxu0 0.0
    %269 = vmatpush2.msra.mxu0 0.0
    %270 = vmatprep.subr.mxu0 0.0
    %271 = vmatpush2.msra.mxu0 0.0
    %272 = vmatprep.subr.mxu0 0.0
    %273 = vmatpush2.msra.mxu0 0.0
    %274 = vmatprep.subr.mxu0 0.0
    %275 = vmatpush2.msra.mxu0 0.0
    %276 = vmatprep.subr.mxu0 0.0
    %277 = vmatpush2.msra.mxu0 0.0
    %278 = vmatprep.subr.mxu0 0.0
    %279 = vmatpush2.msra.mxu0 0.0
    %280 = vmatprep.subr.mxu0 0.0
    %281 = vmatpush2.msra.mxu0 0.0
    %282 = vmatprep.subr.mxu0 0.0
    %283 = vmatpush2.msra.mxu0 0.0
    %284 = vmatprep.subr.mxu0 0.0
    %285 = vmatpush2.msra.mxu0 0.0
    %286 = vmatprep.subr.mxu0 0.0
    %287 = vmatpush2.msra.mxu0 0.0
    %288 = vmatprep.subr.mxu0 0.0
    %289 = vmatpush2.msra.mxu0 0.0
    %290 = vmatprep.subr.mxu0 0.0
    %291 = vmatpush2.msra.mxu0 0.0
    %292 = vmatprep.subr.mxu0 0.0
    %293 = vmatpush2.msra.mxu0 0.0
    %294 = vmatprep.subr.mxu0 0.0
    %295 = vmatpush2.msra.mxu0 0.0
    %296 = vmatprep.subr.mxu0 0.0
    %297 = vmatpush2.msra.mxu0 0.0
    %298 = vmatprep.mubr.f32.mxu0 0.0
    %299 = vmatmul.mubr.f32.gmra.mxu0 %v162
    %v300 = vpop.f32.mrf.mxu0
    %v301 = vadd.f32 0.0, %v300
    %v302 = vpop.f32.mrf.mxu0
    %303 = vdwg.mxu0
    %304 = vmatprep.subr.mxu0 0.0
    %305 = vmatpush1.msra.mxu0 0.0
    %306 = vmatprep.subr.mxu0 0.0
    %307 = vmatpush1.msra.mxu0 0.0
    %308 = vmatprep.subr.mxu0 0.0
    %309 = vmatpush1.msra.mxu0 0.0
    %310 = vmatprep.subr.mxu0 0.0
    %311 = vmatpush1.msra.mxu0 0.0
    %312 = vmatprep.subr.mxu0 0.0
    %313 = vmatpush1.msra.mxu0 0.0
    %314 = vmatprep.subr.mxu0 0.0
    %315 = vmatpush1.msra.mxu0 0.0
    %316 = vmatprep.subr.mxu0 0.0
    %317 = vmatpush1.msra.mxu0 0.0
    %318 = vmatprep.subr.mxu0 0.0
    %319 = vmatpush1.msra.mxu0 0.0
    %320 = vmatprep.subr.mxu0 0.0
    %321 = vmatpush1.msra.mxu0 0.0
    %322 = vmatprep.subr.mxu0 0.0
    %323 = vmatpush1.msra.mxu0 0.0
    %324 = vmatprep.subr.mxu0 0.0
    %325 = vmatpush1.msra.mxu0 0.0
    %326 = vmatprep.subr.mxu0 0.0
    %327 = vmatpush1.msra.mxu0 0.0
    %328 = vmatprep.subr.mxu0 0.0
    %329 = vmatpush1.msra.mxu0 0.0
    %330 = vmatprep.subr.mxu0 0.0
    %331 = vmatpush1.msra.mxu0 0.0
    %332 = vmatprep.subr.mxu0 0.0
    %333 = vmatpush1.msra.mxu0 %v137
    %334 = vmatprep.subr.mxu0 0.0
    %335 = vmatpush1.msra.mxu0 %v132
    %336 = vmatprep.subr.mxu0 0.0
    %337 = vmatpush2.msra.mxu0 0.0
    %338 = vmatprep.subr.mxu0 0.0
    %339 = vmatpush2.msra.mxu0 0.0
    %340 = vmatprep.subr.mxu0 0.0
    %341 = vmatpush2.msra.mxu0 0.0
    %342 = vmatprep.subr.mxu0 0.0
    %343 = vmatpush2.msra.mxu0 0.0
    %344 = vmatprep.subr.mxu0 0.0
    %345 = vmatpush2.msra.mxu0 0.0
    %346 = vmatprep.subr.mxu0 0.0
    %347 = vmatpush2.msra.mxu0 0.0
    %348 = vmatprep.subr.mxu0 0.0
    %349 = vmatpush2.msra.mxu0 0.0
    %350 = vmatprep.subr.mxu0 0.0
    %351 = vmatpush2.msra.mxu0 0.0
    %352 = vmatprep.subr.mxu0 0.0
    %353 = vmatpush2.msra.mxu0 0.0
    %354 = vmatprep.subr.mxu0 0.0
    %355 = vmatpush2.msra.mxu0 0.0
    %356 = vmatprep.subr.mxu0 0.0
    %357 = vmatpush2.msra.mxu0 0.0
    %358 = vmatprep.subr.mxu0 0.0
    %359 = vmatpush2.msra.mxu0 0.0
    %360 = vmatprep.subr.mxu0 0.0
    %361 = vmatpush2.msra.mxu0 0.0
    %362 = vmatprep.subr.mxu0 0.0
    %363 = vmatpush2.msra.mxu0 0.0
    %364 = vmatprep.subr.mxu0 0.0
    %365 = vmatpush2.msra.mxu0 0.0
    %366 = vmatprep.subr.mxu0 0.0
    %367 = vmatpush2.msra.mxu0 0.0
    %368 = vmatprep.mubr.f32.mxu0 0.0
    %369 = vmatmul.mubr.f32.gmra.mxu0 %v162
    %v370 = vpop.f32.mrf.mxu0
    %v371 = vadd.f32 0.0, %v370
    %v372 = vpop.f32.mrf.mxu0
    %373 = vdwg.mxu0
    %374 = vmatprep.subr.mxu0 0.0
    %375 = vmatpush1.msra.mxu0 0.0
    %376 = vmatprep.subr.mxu0 0.0
    %377 = vmatpush1.msra.mxu0 0.0
    %378 = vmatprep.subr.mxu0 0.0
    %379 = vmatpush1.msra.mxu0 0.0
    %380 = vmatprep.subr.mxu0 0.0
    %381 = vmatpush1.msra.mxu0 0.0
    %382 = vmatprep.subr.mxu0 0.0
    %383 = vmatpush1.msra.mxu0 0.0
    %384 = vmatprep.subr.mxu0 0.0
    %385 = vmatpush1.msra.mxu0 0.0
    %386 = vmatprep.subr.mxu0 0.0
    %387 = vmatpush1.msra.mxu0 0.0
    %388 = vmatprep.subr.mxu0 0.0
    %389 = vmatpush1.msra.mxu0 0.0
    %390 = vmatprep.subr.mxu0 0.0
    %391 = vmatpush1.msra.mxu0 0.0
    %392 = vmatprep.subr.mxu0 0.0
    %393 = vmatpush1.msra.mxu0 0.0
    %394 = vmatprep.subr.mxu0 0.0
    %395 = vmatpush1.msra.mxu0 0.0
    %396 = vmatprep.subr.mxu0 0.0
    %397 = vmatpush1.msra.mxu0 0.0
    %398 = vmatprep.subr.mxu0 0.0
    %399 = vmatpush1.msra.mxu0 0.0
    %400 = vmatprep.subr.mxu0 0.0
    %401 = vmatpush1.msra.mxu0 0.0
    %402 = vmatprep.subr.mxu0 0.0
    %403 = vmatpush1.msra.mxu0 %v147
    %404 = vmatprep.subr.mxu0 0.0
    %405 = vmatpush1.msra.mxu0 %v142
    %406 = vmatprep.subr.mxu0 0.0
    %407 = vmatpush2.msra.mxu0 0.0
    %408 = vmatprep.subr.mxu0 0.0
    %409 = vmatpush2.msra.mxu0 0.0
    %410 = vmatprep.subr.mxu0 0.0
    %411 = vmatpush2.msra.mxu0 0.0
    %412 = vmatprep.subr.mxu0 0.0
    %413 = vmatpush2.msra.mxu0 0.0
    %414 = vmatprep.subr.mxu0 0.0
    %415 = vmatpush2.msra.mxu0 0.0
    %416 = vmatprep.subr.mxu0 0.0
    %417 = vmatpush2.msra.mxu0 0.0
    %418 = vmatprep.subr.mxu0 0.0
    %419 = vmatpush2.msra.mxu0 0.0
    %420 = vmatprep.subr.mxu0 0.0
    %421 = vmatpush2.msra.mxu0 0.0
    %422 = vmatprep.subr.mxu0 0.0
    %423 = vmatpush2.msra.mxu0 0.0
    %424 = vmatprep.subr.mxu0 0.0
    %425 = vmatpush2.msra.mxu0 0.0
    %426 = vmatprep.subr.mxu0 0.0
    %427 = vmatpush2.msra.mxu0 0.0
    %428 = vmatprep.subr.mxu0 0.0
    %429 = vmatpush2.msra.mxu0 0.0
    %430 = vmatprep.subr.mxu0 0.0
    %431 = vmatpush2.msra.mxu0 0.0
    %432 = vmatprep.subr.mxu0 0.0
    %433 = vmatpush2.msra.mxu0 0.0
    %434 = vmatprep.subr.mxu0 0.0
    %435 = vmatpush2.msra.mxu0 0.0
    %436 = vmatprep.subr.mxu0 0.0
    %437 = vmatpush2.msra.mxu0 0.0
    %438 = vmatprep.mubr.f32.mxu0 0.0
    %439 = vmatmul.mubr.f32.gmra.mxu0 %v162
    %v440 = vpop.f32.mrf.mxu0
    %v441 = vadd.f32 0.0, %v440
    %v442 = vpop.f32.mrf.mxu0
    %443 = vdwg.mxu0
    %444 = vmatprep.subr.mxu0 0.0
    %445 = vmatpush1.msra.mxu0 0.0
    %446 = vmatprep.subr.mxu0 0.0
    %447 = vmatpush1.msra.mxu0 0.0
    %448 = vmatprep.subr.mxu0 0.0
    %449 = vmatpush1.msra.mxu0 0.0
    %450 = vmatprep.subr.mxu0 0.0
    %451 = vmatpush1.msra.mxu0 0.0
    %452 = vmatprep.subr.mxu0 0.0
    %453 = vmatpush1.msra.mxu0 0.0
    %454 = vmatprep.subr.mxu0 0.0
    %455 = vmatpush1.msra.mxu0 0.0
    %456 = vmatprep.subr.mxu0 0.0
    %457 = vmatpush1.msra.mxu0 0.0
    %458 = vmatprep.subr.mxu0 0.0
    %459 = vmatpush1.msra.mxu0 0.0
    %460 = vmatprep.subr.mxu0 0.0
    %461 = vmatpush1.msra.mxu0 0.0
    %462 = vmatprep.subr.mxu0 0.0
    %463 = vmatpush1.msra.mxu0 0.0
    %464 = vmatprep.subr.mxu0 0.0
    %465 = vmatpush1.msra.mxu0 0.0
    %466 = vmatprep.subr.mxu0 0.0
    %467 = vmatpush1.msra.mxu0 0.0
    %468 = vmatprep.subr.mxu0 0.0
    %469 = vmatpush1.msra.mxu0 0.0
    %470 = vmatprep.subr.mxu0 0.0
    %471 = vmatpush1.msra.mxu0 0.0
    %472 = vmatprep.subr.mxu0 0.0
    %473 = vmatpush1.msra.mxu0 %v157
    %474 = vmatprep.subr.mxu0 0.0
    %475 = vmatpush1.msra.mxu0 %v152
    %476 = vmatprep.subr.mxu0 0.0
    %477 = vmatpush2.msra.mxu0 0.0
    %478 = vmatprep.subr.mxu0 0.0
    %479 = vmatpush2.msra.mxu0 0.0
    %480 = vmatprep.subr.mxu0 0.0
    %481 = vmatpush2.msra.mxu0 0.0
    %482 = vmatprep.subr.mxu0 0.0
    %483 = vmatpush2.msra.mxu0 0.0
    %484 = vmatprep.subr.mxu0 0.0
    %485 = vmatpush2.msra.mxu0 0.0
    %486 = vmatprep.subr.mxu0 0.0
    %487 = vmatpush2.msra.mxu0 0.0
    %488 = vmatprep.subr.mxu0 0.0
    %489 = vmatpush2.msra.mxu0 0.0
    %490 = vmatprep.subr.mxu0 0.0
    %491 = vmatpush2.msra.mxu0 0.0
    %492 = vmatprep.subr.mxu0 0.0
    %493 = vmatpush2.msra.mxu0 0.0
    %494 = vmatprep.subr.mxu0 0.0
    %495 = vmatpush2.msra.mxu0 0.0
    %496 = vmatprep.subr.mxu0 0.0
    %497 = vmatpush2.msra.mxu0 0.0
    %498 = vmatprep.subr.mxu0 0.0
    %499 = vmatpush2.msra.mxu0 0.0
    %500 = vmatprep.subr.mxu0 0.0
    %501 = vmatpush2.msra.mxu0 0.0
    %502 = vmatprep.subr.mxu0 0.0
    %503 = vmatpush2.msra.mxu0 0.0
    %504 = vmatprep.subr.mxu0 0.0
    %505 = vmatpush2.msra.mxu0 0.0
    %506 = vmatprep.subr.mxu0 0.0
    %507 = vmatpush2.msra.mxu0 0.0
    %508 = vmatprep.mubr.f32.mxu0 0.0
    %509 = vmatmul.mubr.f32.gmra.mxu0 %v162
    %v510 = vpop.f32.mrf.mxu0
    %v511 = vadd.f32 0.0, %v510
    %v512 = vpop.f32.mrf.mxu0
    %513 = vdwg.mxu0
    %v514 = vmul.f32 %v231, %v231
    %v515 = vmul.f32 %v301, %v301
    %v516 = vmul.f32 %v231, %v301
    %v517 = vsub.f32 %v371, %v514
    %v518 = vsub.f32 %v441, %v515
    %v519 = vsub.f32 %v511, %v516
    %v520 = vmul.f32 %v516, 2.0
    %v521 = vadd.f32 %v520, 0.0001
    %v522 = vmul.f32 %v519, 2.0
    %v523 = vadd.f32 %v522, 0.0009
    %v524 = vmul.f32 %v521, %v523
    %v525 = vadd.f32 %v514, %v515
    %v526 = vadd.f32 %v525, 0.0001
    %v527 = vadd.f32 %v517, %v518
    %v528 = vadd.f32 %v527, 0.0009
    %v529 = vmul.f32 %v526, %v528
    %v530 = vrcp.pop %v529
    %v531 = vmul.f32 %v524, %v530
    %vm532 = vcmask 390144
    %v533 = vsel %vm532, %v531, 0.0
    %534 = vadd.xlane.f32.xlu0 %v533
    %v535 = vpop.xlane.xlu0 %534
    %v536 = vrot.slane %v535, 4
    %v537 = vadd.f32 %v535, %v536
    %v538 = vrot.slane %v537, 2
    %v539 = vadd.f32 %v537, %v538
    %v540 = vrot.slane %v539, 1
    %v541 = vadd.f32 %v539, %v540
    %s542 = vtos %v541
    %v543 = vstv %s542
    %v544 = vadd.f32 %v543, 0.0
    %vm545 = vcmask 0
    %546 = vst.msk [vmem:[#allocation2] sm:$0x1] %vm545, %v544
    // Predicated region
    $region18: #{_ssim_loss_impl.1} parent=1 // pred_check
      _
    $region19: #{_ssim_loss_impl.1} parent=1 // pred_check_branch
      %548 = sbr.rel (0) target = $region21
    $region20: #{_ssim_loss_impl.1} parent=1 // pred_region
      %s550 = ssub.s32 16, 16
      %551 = vsyncadd [#allocation3], %s550
      %s553 = sshll.u32 [#allocation2], 4
      %s554 = int_to_ptr.vmem [resolvable:$true] %s553
      %556 = dma.vmem_to_hbm [thread:$0]  %s554, 16, %s4, [#allocation3]
    $region21: #{_ssim_loss_impl.1} parent=1 // pred_fallthru
      _
    // Predicated region
    $region22: #{_ssim_loss_impl.1} parent=1 // pred_check
      _
    $region23: #{_ssim_loss_impl.1} parent=1 // pred_check_branch
      %558 = sbr.rel (0) target = $region25
    $region24: #{_ssim_loss_impl.1} parent=1 // pred_region
      %559 = dma.done [#allocation3], 16
    $region25: #{_ssim_loss_impl.1} parent=1 // pred_fallthru
      _
    %560 = vsyncpa [#allocation3], 1

</llo_original>
